<compile_context>
chip_gen: v7x
topology: tpu7x:2x2x1
jax: 0.10.0
libtpu: 0.0.40
codegen_flags: <defaults>
</compile_context>

<pallas_src>
import jax
import jax.numpy as jnp
from jax.experimental import pallas as pl
from jax.experimental.pallas import tpu as pltpu


def _round_up(x, m):
    return (x + m - 1) // m * m


def _make_encoder_kernel(normalize: bool):
    """y = x @ W + b with optional L2 normalization along the feature axis.

    The contraction axis is the single grid axis; `acc_ref` is a resident f32
    VMEM accumulator. Epilogue (bias, normalize, cast, store) runs only on the
    final K step, selected at trace time via the `normalize` Python bool.
    """

    def kernel(x_ref, w_ref, b_ref, o_ref, acc_ref):
        k = pl.program_id(0)

        @pl.when(k == 0)
        def _init():
            acc_ref[...] = jnp.zeros_like(acc_ref)

        acc_ref[...] += jnp.dot(
            x_ref[...], w_ref[...], preferred_element_type=jnp.float32
        )

        @pl.when(k == pl.num_programs(0) - 1)
        def _finalize():
            y = acc_ref[...] + b_ref[...]
            if normalize:
                # F.normalize(y, p=2, dim=1): y / max(||y||_2, 1e-12), done as a
                # fused rsqrt (EUP) + multiply instead of sqrt + divide.
                sq = jnp.sum(y * y, axis=-1, keepdims=True)
                y = y * jax.lax.rsqrt(jnp.maximum(sq, 1e-24))
            o_ref[...] = y.astype(o_ref.dtype)

    return kernel


def base_encoder_forward(x_nchw, w, b, *, normalize=True, tk=512):
    """Forward pass of BaseEncoder.

    Args:
      x_nchw: [B, C, H, W] float32 input (PyTorch NCHW layout).
      w:      [C*H*W, embedding_dim] projection weight.
      b:      [embedding_dim] projection bias.
      normalize: if True, L2-normalize embeddings along dim=1 (feature axis).
      tk:     contraction tile size (multiple of 128; sized to fit double-
              buffered bf16 tiles comfortably inside v7x's 64 MiB VMEM).

    Returns:
      [B, embedding_dim] float32 embeddings.
    """
    B = x_nchw.shape[0]
    D, E = w.shape
    Ep = _round_up(E, 128)   # lane-dense output / weight columns
    Dp = _round_up(D, tk)    # whole number of K tiles
    num_k = Dp // tk

    # Glue (wrapper-side XLA): flatten NCHW -> [B, D] (matches torch.flatten(x, 1)),
    # zero-pad to the tile grid, and stream x / W as bf16 (f32 accumulation in-kernel).
    x2d = x_nchw.reshape(B, D)
    x2d = jnp.pad(x2d, ((0, 0), (0, Dp - D))).astype(jnp.bfloat16)
    w_p = jnp.pad(w, ((0, Dp - D), (0, Ep - E))).astype(jnp.bfloat16)
    b_p = jnp.pad(b.reshape(1, E), ((0, 0), (0, Ep - E))).astype(jnp.float32)

    kernel = _make_encoder_kernel(normalize)

    cost = pl.CostEstimate(
        flops=2 * B * Dp * Ep,
        transcendentals=B if normalize else 0,
        bytes_accessed=B * Dp * 2 + Dp * Ep * 2 + Ep * 4 + B * Ep * 4,
    )

    out = pl.pallas_call(
        kernel,
        out_shape=jax.ShapeDtypeStruct((B, Ep), jnp.float32),
        grid_spec=pltpu.PrefetchScalarGridSpec(
            num_scalar_prefetch=0,
            grid=(num_k,),
            in_specs=[
                pl.BlockSpec((B, tk), lambda k: (0, k)),     # x tile  [B, tk]
                pl.BlockSpec((tk, Ep), lambda k: (k, 0)),    # W tile  [tk, Ep]
                pl.BlockSpec((1, Ep), lambda k: (0, 0)),     # bias    [1, Ep]
            ],
            out_specs=pl.BlockSpec((B, Ep), lambda k: (0, 0)),
            scratch_shapes=[pltpu.VMEM((B, Ep), jnp.float32)],
        ),
        compiler_params=pltpu.CompilerParams(
            dimension_semantics=("arbitrary",),
            # Explicit VMEM budget: double-buffered bf16 (B,tk)+(tk,Ep) tiles
            # plus the small f32 accumulator stay far below 32 MiB, which also
            # leaves headroom on v7x's 64 MiB physical VMEM.
            vmem_limit_bytes=32 * 1024 * 1024,
        ),
        cost_estimate=cost,
    )(x2d, w_p, b_p)

    return out[:, :E]


if __name__ == "__main__":
    # Small shapes consistent with the module: batch=2, channels=4, spatial=16,
    # embedding_dim=64.
    B, C, H, W = 2, 4, 16, 16
    embedding_dim = 64
    D = C * H * W

    key = jax.random.PRNGKey(0)
    kx, kw, kb = jax.random.split(key, 3)
    x = jax.random.normal(kx, (B, C, H, W), dtype=jnp.float32)
    # Deterministic parameter init (synthetic; no checkpoint load).
    w = jax.random.normal(kw, (D, embedding_dim), dtype=jnp.float32) * 0.02
    b = jax.random.normal(kb, (embedding_dim,), dtype=jnp.float32) * 0.01

    y = base_encoder_forward(x, w, b, normalize=True)
    y = jax.block_until_ready(y)

    # Reference: same bf16 streaming with f32 accumulation as the kernel.
    y_ref = (
        jnp.dot(
            x.reshape(B, D).astype(jnp.bfloat16),
            w.astype(jnp.bfloat16),
            preferred_element_type=jnp.float32,
        )
        + b
    )
    y_ref = y_ref * jax.lax.rsqrt(
        jnp.maximum(jnp.sum(y_ref * y_ref, axis=1, keepdims=True), 1e-24)
    )

    assert y.shape == (B, embedding_dim)
    assert jnp.allclose(y, y_ref, atol=2e-3, rtol=2e-3), float(
        jnp.max(jnp.abs(y - y_ref))
    )

    print("KERNEL_OK")
</pallas_src>

<mosaic_0001>
module attributes {stable_mosaic.version = 11 : i64} {
  func.func @kernel(%arg0: i32, %arg1: memref<2x512xbf16, #tpu.memory_space<vmem>>, %arg2: memref<512x128xbf16, #tpu.memory_space<vmem>>, %arg3: memref<1x128xf32, #tpu.memory_space<vmem>>, %arg4: memref<2x128xf32, #tpu.memory_space<vmem>>, %arg5: memref<2x128xf32, #tpu.memory_space<vmem>>) attributes {dimension_semantics = [#tpu.dimension_semantics<arbitrary>], iteration_bounds = array<i64: 2>, scalar_prefetch = 0 : i64, scratch_operands = 1 : i64, tpu.core_type = #tpu.core_type<tc>, window_params = [{transform_indices = @transform_0, window_bounds = array<i64: 2, 512>}, {transform_indices = @transform_1, window_bounds = array<i64: 512, 128>}, {pipeline_mode = #tpu.pipeline_mode<synchronous>, transform_indices = @transform_2, window_bounds = array<i64: 1, 128>}, {pipeline_mode = #tpu.pipeline_mode<synchronous>, transform_indices = @transform_3, window_bounds = array<i64: 2, 128>}]} {
    %c0_i32 = arith.constant 0 : i32
    %0 = arith.cmpi eq, %arg0, %c0_i32 : i32
    %1 = arith.extui %0 : i1 to i32
    %c0_i32_0 = arith.constant 0 : i32
    %2 = arith.cmpi ne, %1, %c0_i32_0 : i32
    scf.if %2 {
      %cst_9 = arith.constant 0.000000e+00 : f32
      %12 = vector.broadcast %cst_9 : f32 to vector<2x128xf32>
      %c0_10 = arith.constant 0 : index
      %c0_11 = arith.constant 0 : index
      %13 = vector.load %arg5[%c0_10, %c0_11] : memref<2x128xf32, #tpu.memory_space<vmem>>, vector<2x128xf32>
      tpu.vector_store %arg5[%c0_10, %c0_11], %12 {strides = array<i32>} : memref<2x128xf32, #tpu.memory_space<vmem>>, vector<2x128xf32>,
    } else {
    }
    %c0 = arith.constant 0 : index
    %c0_1 = arith.constant 0 : index
    %3 = vector.load %arg5[%c0, %c0_1] : memref<2x128xf32, #tpu.memory_space<vmem>>, vector<2x128xf32>
    %c0_2 = arith.constant 0 : index
    %c0_3 = arith.constant 0 : index
    %4 = vector.load %arg1[%c0_2, %c0_3] : memref<2x512xbf16, #tpu.memory_space<vmem>>, vector<2x512xbf16>
    %c0_4 = arith.constant 0 : index
    %c0_5 = arith.constant 0 : index
    %5 = vector.load %arg2[%c0_4, %c0_5] : memref<512x128xbf16, #tpu.memory_space<vmem>>, vector<512x128xbf16>
    %cst = arith.constant dense<0.000000e+00> : vector<2x128xf32>
    %6 = tpu.matmul %4, %5, %cst {dimension_numbers = #tpu.dot_dimension_numbers<[1], [0], [0], [1], [0, 0, 1, 1], [], []>} : vector<2x512xbf16>, vector<512x128xbf16>, vector<2x128xf32> -> vector<2x128xf32>
    %7 = arith.addf %3, %6 : vector<2x128xf32>
    %c0_6 = arith.constant 0 : index
    %c0_7 = arith.constant 0 : index
    %8 = vector.load %arg5[%c0_6, %c0_7] : memref<2x128xf32, #tpu.memory_space<vmem>>, vector<2x128xf32>
    tpu.vector_store %arg5[%c0_6, %c0_7], %7 {strides = array<i32>} : memref<2x128xf32, #tpu.memory_space<vmem>>, vector<2x128xf32>,
    %c1_i32 = arith.constant 1 : i32
    %9 = arith.cmpi eq, %arg0, %c1_i32 : i32
    %10 = arith.extui %9 : i1 to i32
    %c0_i32_8 = arith.constant 0 : i32
    %11 = arith.cmpi ne, %10, %c0_i32_8 : i32
    scf.if %11 {
      %c0_9 = arith.constant 0 : index
      %c0_10 = arith.constant 0 : index
      %12 = vector.load %arg5[%c0_9, %c0_10] : memref<2x128xf32, #tpu.memory_space<vmem>>, vector<2x128xf32>
      %c0_11 = arith.constant 0 : index
      %c0_12 = arith.constant 0 : index
      %13 = vector.load %arg3[%c0_11, %c0_12] : memref<1x128xf32, #tpu.memory_space<vmem>>, vector<1x128xf32>
      %14 = vector.broadcast %13 : vector<1x128xf32> to vector<2x128xf32>
      %15 = arith.addf %12, %14 : vector<2x128xf32>
      %16 = arith.mulf %15, %15 : vector<2x128xf32>
      %cst_13 = arith.constant dense<0.000000e+00> : vector<2xf32>
      %17 = vector.multi_reduction <add>, %16, %cst_13 [1] : vector<2x128xf32> to vector<2xf32>
      %18 = vector.shape_cast %17 : vector<2xf32> to vector<2x1xf32>
      %cst_14 = arith.constant 1.000000e-24 : f32
      %19 = vector.broadcast %cst_14 : f32 to vector<2x1xf32>
      %20 = arith.maximumf %18, %19 : vector<2x1xf32>
      %21 = math.rsqrt %20 : vector<2x1xf32>
      %22 = vector.broadcast %21 : vector<2x1xf32> to vector<2x128xf32>
      %23 = arith.mulf %15, %22 : vector<2x128xf32>
      %c0_15 = arith.constant 0 : index
      %c0_16 = arith.constant 0 : index
      %24 = vector.load %arg4[%c0_15, %c0_16] : memref<2x128xf32, #tpu.memory_space<vmem>>, vector<2x128xf32>
      tpu.vector_store %arg4[%c0_15, %c0_16], %23 {strides = array<i32>} : memref<2x128xf32, #tpu.memory_space<vmem>>, vector<2x128xf32>,
    } else {
    }
    return
  }
  func.func @transform_0(%arg0: i32) -> (i32, i32) {
    %c0_i32 = arith.constant 0 : i32
    %c0_i32_0 = arith.constant 0 : i32
    return %c0_i32, %arg0 : i32, i32
  }
  func.func @transform_1(%arg0: i32) -> (i32, i32) {
    %c0_i32 = arith.constant 0 : i32
    %c0_i32_0 = arith.constant 0 : i32
    return %arg0, %c0_i32 : i32, i32
  }
  func.func @transform_2(%arg0: i32) -> (i32, i32) {
    %c0_i32 = arith.constant 0 : i32
    %c0_i32_0 = arith.constant 0 : i32
    %c0_i32_1 = arith.constant 0 : i32
    return %c0_i32, %c0_i32_0 : i32, i32
  }
  func.func @transform_3(%arg0: i32) -> (i32, i32) {
    %c0_i32 = arith.constant 0 : i32
    %c0_i32_0 = arith.constant 0 : i32
    %c0_i32_1 = arith.constant 0 : i32
    return %c0_i32, %c0_i32_0 : i32, i32
  }
}

</mosaic_0001>

<llo_original>
// kernel: tpu_custom_call.1
$region0: #{tpu_custom_call.1}
  #allocation0 [shape = 'u32[]', space=smem, size = 0x4, offset = 0x4, fixed_abs, tag = 'smem constant byte address 0x4 - core index']
  #allocation1 [shape = 'u32[144,128]{1,0:T(1,128)}', space=vmem, size = 0x12000, scoped, tag = 'internal scratch']
  #allocation2 [shape = 'f32[2,128]{1,0:T(2,128)}', space=vmem, size = 0x400, scoped, tag = 'scratch operand']
  %s0 = inlined_call_operand.hbm [shape: bf16[2,1024], index: 0, kind: input, shape index: {}]
  %s1 = inlined_call_operand.hbm [shape: bf16[1024,128], index: 1, kind: input, shape index: {}]
  %s2 = inlined_call_operand.vmem [shape: f32[1,128], index: 2, kind: input, shape index: {}]
  %s3 = inlined_call_operand.hbm [shape: f32[2,128], index: 3, kind: output, shape index: {}]
  %s4 = sld [smem:[#allocation0]]
  $region61: #{tpu_custom_call.1} parent=0
    _
  %s6 = ssub.s32 1, %s4
  %s7 = scalar_select 0, %s6, %s4
  $region1: #{tpu_custom_call.1} parent=0
    #allocation3 [shape = 'u8[4096]{0}', space=vmem, size = 0x1000, scoped, tag = 'input window, operand 0']
    #allocation4 [shape = 's32[2]{0}', space=sflag, size = 0x8, scoped, tag = 'scoped memory for tpu_custom_call.1']
    #allocation5 [shape = 's32[2]{0}', space=sflag, size = 0x8, scoped, tag = 'scoped memory for tpu_custom_call.1']
    #allocation6 [shape = 'u8[262144]{0}', space=vmem, size = 0x40000, scoped, tag = 'input window, operand 1']
    #allocation7 [shape = 's32[2]{0}', space=sflag, size = 0x8, scoped, tag = 'scoped memory for tpu_custom_call.1']
    #allocation8 [shape = 'u8[1024]{0}', space=vmem, size = 0x400, scoped, tag = 'output window, operand 0, single buffered']
    %8 = vsyncpa [#allocation4], 0
    %s9 = scalar_lea.sflag [#allocation4], 1
    %10 = vsyncpa %s9, 0
    %11 = vsyncpa [#allocation7], 0
    %s12 = scalar_lea.sflag [#allocation7], 1
    %13 = vsyncpa %s12, 0
    %14 = vsyncpa [#allocation5], 0
    loop: start=0, step=1, limit=4
    $region2: #{tpu_custom_call.1} parent=1 // loop_pre_header
      _
    $region3: #{tpu_custom_call.1} parent=1 // loop_header
      %s16 = sphi 0, %s20
      %p17 = scmp.ge.s32.totalorder %s16, 4
      %s26 = sphi 0, %s28
      %s29 = sphi 0, %s26
      %s30 = sphi 0, %s29
      %s46 = sphi 0, %s30
      %s52 = sphi 0, %s54
      %s55 = sphi 0, %s52
      %s56 = sphi 0, %s55
      %s72 = sphi 0, %s56
      %s76 = sphi 0, %s76
      %s78 = sphi 0, %s76
      %s79 = sphi 0, %s78
      %s93 = sphi 0, %s79
      %s97 = sphi 0, %s97
      %s99 = sphi 0, %s97
      %s100 = sphi 0, %s99
      %s114 = sphi 0, %s100
    $region4: #{tpu_custom_call.1} parent=1 // loop_header_branch
      %19 = sbr.rel (%p17) target = $region8
    $region5: #{tpu_custom_call.1} parent=1 // loop_body
      %s21 = ssub.s32 %s16, 1
      %s22 = ssub.s32 %s16, 2
      %s23 = sadd.s32 %s16, 1
      %s24 = ssub.s32 %s16, %s23
      %p25 = scmp.eq.s32.totalorder %s24, 0
      %s27 = sadd.s32 %s26, 1
      %s28 = scalar_select %p25, %s26, %s27
      %p31 = pneg %p25
      %p32 = scmp.eq.s32.totalorder %s16, 1
      %p33 = por %p31, %p32
      %p34 = scmp.ne.s32.totalorder %s26, %s29
      %p35 = scmp.eq.s32.totalorder %s16, 0
      %p36 = por %p34, %p35
      %p37 = scmp.ne.s32.totalorder %s26, %s29
      %p38 = scmp.eq.s32.totalorder %s21, 1
      %p39 = por %p37, %p38
      %p40 = scmp.ne.s32.totalorder %s29, %s30
      %p41 = scmp.eq.s32.totalorder %s21, 0
      %p42 = por %p40, %p41
      %p43 = scmp.ne.s32.totalorder %s29, %s30
      %p44 = scmp.eq.s32.totalorder %s22, 1
      %p45 = por %p43, %p44
      %p47 = scmp.ne.s32.totalorder %s30, %s46
      %p48 = scmp.eq.s32.totalorder %s22, 0
      %p49 = por %p47, %p48
      %s50 = ssub.s32 %s16, %s23
      %p51 = scmp.eq.s32.totalorder %s50, 0
      %s53 = sadd.s32 %s52, 1
      %s54 = scalar_select %p51, %s52, %s53
      %p57 = pneg %p51
      %p58 = scmp.eq.s32.totalorder %s16, 1
      %p59 = por %p57, %p58
      %p60 = scmp.ne.s32.totalorder %s52, %s55
      %p61 = scmp.eq.s32.totalorder %s16, 0
      %p62 = por %p60, %p61
      %p63 = scmp.ne.s32.totalorder %s52, %s55
      %p64 = scmp.eq.s32.totalorder %s21, 1
      %p65 = por %p63, %p64
      %p66 = scmp.ne.s32.totalorder %s55, %s56
      %p67 = scmp.eq.s32.totalorder %s21, 0
      %p68 = por %p66, %p67
      %p69 = scmp.ne.s32.totalorder %s55, %s56
      %p70 = scmp.eq.s32.totalorder %s22, 1
      %p71 = por %p69, %p70
      %p73 = scmp.ne.s32.totalorder %s56, %s72
      %p74 = scmp.eq.s32.totalorder %s22, 0
      %p75 = por %p73, %p74
      %s77 = sadd.s32 %s76, 1
      %p80 = scmp.eq.s32.totalorder %s16, 1
      %p81 = scmp.ne.s32.totalorder %s76, %s78
      %p82 = scmp.eq.s32.totalorder %s16, 0
      %p83 = por %p81, %p82
      %p84 = scmp.ne.s32.totalorder %s76, %s78
      %p85 = scmp.eq.s32.totalorder %s21, 1
      %p86 = por %p84, %p85
      %p87 = scmp.ne.s32.totalorder %s78, %s79
      %p88 = scmp.eq.s32.totalorder %s21, 0
      %p89 = por %p87, %p88
      %p90 = scmp.ne.s32.totalorder %s78, %s79
      %p91 = scmp.eq.s32.totalorder %s22, 1
      %p92 = por %p90, %p91
      %p94 = scmp.ne.s32.totalorder %s79, %s93
      %p95 = scmp.eq.s32.totalorder %s22, 0
      %p96 = por %p94, %p95
      %s98 = sadd.s32 %s97, 1
      %p101 = scmp.eq.s32.totalorder %s16, 1
      %p102 = scmp.ne.s32.totalorder %s97, %s99
      %p103 = scmp.eq.s32.totalorder %s16, 0
      %p104 = por %p102, %p103
      %p105 = scmp.ne.s32.totalorder %s97, %s99
      %p106 = scmp.eq.s32.totalorder %s21, 1
      %p107 = por %p105, %p106
      %p108 = scmp.ne.s32.totalorder %s99, %s100
      %p109 = scmp.eq.s32.totalorder %s21, 0
      %p110 = por %p108, %p109
      %p111 = scmp.ne.s32.totalorder %s99, %s100
      %p112 = scmp.eq.s32.totalorder %s22, 1
      %p113 = por %p111, %p112
      %p115 = scmp.ne.s32.totalorder %s100, %s114
      %p116 = scmp.eq.s32.totalorder %s22, 0
      %p117 = por %p115, %p116
      %p118 = scmp.le.s32.totalorder 1, %s16
      %p119 = scmp.lt.s32.totalorder %s16, 3
      %p120 = pnand %p118, %p119
      %p121 = pneg %p120
      // Predicated region
      $region9: #{tpu_custom_call.1} parent=5 // pred_check
        _
      $region10: #{tpu_custom_call.1} parent=5 // pred_check_branch
        %123 = sbr.rel (%p120) target = $region12
      $region11: #{tpu_custom_call.1} parent=5 // pred_region
        %s124 = ssub.s32 %s16, 1
        // Predicated region
        $region13: #{tpu_custom_call.1} parent=11 // pred_check
          %p125 = pneg %p89
        $region14: #{tpu_custom_call.1} parent=11 // pred_check_branch
          %127 = sbr.rel (%p125) target = $region16
        $region15: #{tpu_custom_call.1} parent=11 // pred_region
          _
        $region16: #{tpu_custom_call.1} parent=11 // pred_fallthru
          _
      $region12: #{tpu_custom_call.1} parent=5 // pred_fallthru
        _
      %p128 = scmp.lt.s32.totalorder %s16, 2
      // Predicated region
      $region17: #{tpu_custom_call.1} parent=5 // pred_check
        %p129 = pneg %p128
      $region18: #{tpu_custom_call.1} parent=5 // pred_check_branch
        %131 = sbr.rel (%p129) target = $region20
      $region19: #{tpu_custom_call.1} parent=5 // pred_region
        // Predicated region
        $region21: #{tpu_custom_call.1} parent=19 // pred_check
          %p132 = pneg %p36
        $region22: #{tpu_custom_call.1} parent=19 // pred_check_branch
          %134 = sbr.rel (%p132) target = $region24
        $region23: #{tpu_custom_call.1} parent=19 // pred_region
          %s135 = sand.u32 %s26, 1
          %s136 = scalar_lea.sflag [#allocation4], %s135
          %s137 = sand.u32 %s26, 1
          %s138 = smul.addr %s137, 4
          %s139 = scalar_lea.vmem [#allocation3], %s138
          %s140 = smul.u32 4, %s16
          %s142 = ssub.s32 64, 64
          %143 = vsyncadd %s136, %s142
          %s144 = smul.addr %s140, 16
          %s145 = scalar_lea.hbm %s0, %s144
          %s147 = sshll.u32 %s139, 4
          %s148 = int_to_ptr.vmem [resolvable:$true] %s147
          %150 = dma.hbm_to_vmem [thread:$0]  %s145, 64, %s148, %s136
        $region24: #{tpu_custom_call.1} parent=19 // pred_fallthru
          _
        // Predicated region
        $region25: #{tpu_custom_call.1} parent=19 // pred_check
          %p151 = pneg %p62
        $region26: #{tpu_custom_call.1} parent=19 // pred_check_branch
          %153 = sbr.rel (%p151) target = $region28
        $region27: #{tpu_custom_call.1} parent=19 // pred_region
          %s154 = sand.u32 %s52, 1
          %s155 = scalar_lea.sflag [#allocation7], %s154
          %s156 = sand.u32 %s52, 1
          %s157 = smul.addr %s156, 256
          %s158 = scalar_lea.vmem [#allocation6], %s157
          %s159 = smul.u32 64, %s16
          %s161 = ssub.s32 4096, 4096
          %162 = vsyncadd %s155, %s161
          %s163 = smul.addr %s159, 64
          %s164 = scalar_lea.hbm %s1, %s163
          %s165 = sshll.u32 %s158, 4
          %s166 = int_to_ptr.vmem [resolvable:$true] %s165
          %171 = dma.hbm_to_vmem [thread:$0]  %s164, 4096, %s166, %s155, 64, 64, 4
        $region28: #{tpu_custom_call.1} parent=19 // pred_fallthru
          _
      $region20: #{tpu_custom_call.1} parent=5 // pred_fallthru
        _
      %p172 = scmp.le.s32.totalorder 1, %s16
      %p173 = scmp.lt.s32.totalorder %s16, 3
      %p174 = pnand %p172, %p173
      %p175 = pneg %p174
      // Predicated region
      $region29: #{tpu_custom_call.1} parent=5 // pred_check
        _
      $region30: #{tpu_custom_call.1} parent=5 // pred_check_branch
        %177 = sbr.rel (%p174) target = $region32
      $region31: #{tpu_custom_call.1} parent=5 // pred_region
        %s178 = ssub.s32 %s16, 1
        %s179 = sand.u32 %s29, 1
        %s180 = scalar_lea.sflag [#allocation4], %s179
        %s181 = sand.u32 %s29, 1
        %s182 = smul.addr %s181, 4
        %s183 = scalar_lea.vmem [#allocation3], %s182
        // Predicated region
        $region33: #{tpu_custom_call.1} parent=31 // pred_check
          %p184 = pneg %p42
        $region34: #{tpu_custom_call.1} parent=31 // pred_check_branch
          %186 = sbr.rel (%p184) target = $region36
        $region35: #{tpu_custom_call.1} parent=31 // pred_region
          %187 = dma.done %s180, 64
        $region36: #{tpu_custom_call.1} parent=31 // pred_fallthru
          _
        %s188 = sand.u32 %s55, 1
        %s189 = scalar_lea.sflag [#allocation7], %s188
        %s190 = sand.u32 %s55, 1
        %s191 = smul.addr %s190, 256
        %s192 = scalar_lea.vmem [#allocation6], %s191
        // Predicated region
        $region37: #{tpu_custom_call.1} parent=31 // pred_check
          %p193 = pneg %p68
        $region38: #{tpu_custom_call.1} parent=31 // pred_check_branch
          %195 = sbr.rel (%p193) target = $region40
        $region39: #{tpu_custom_call.1} parent=31 // pred_region
          %196 = dma.done %s189, 4096
        $region40: #{tpu_custom_call.1} parent=31 // pred_fallthru
          _
        %s197 = sand.u32 %s29, 1
        %s198 = scalar_lea.sflag [#allocation4], %s197
        %s199 = sand.u32 %s29, 1
        %s200 = smul.addr %s199, 4
        %s201 = scalar_lea.vmem [#allocation3], %s200
        %p202 = pneg %p42
        %p203 = pneg %p39
        %s204 = sand.u32 %s55, 1
        %s205 = scalar_lea.sflag [#allocation7], %s204
        %s206 = sand.u32 %s55, 1
        %s207 = smul.addr %s206, 256
        %s208 = scalar_lea.vmem [#allocation6], %s207
        %p209 = pneg %p68
        %p210 = pneg %p65
        %p211 = pneg %p89
        %p212 = pneg %p86
        %p213 = pneg %p110
        %p214 = pneg %p107
        %s215 = smul.u32 4, %s21
        %s216 = smul.u32 64, %s21
        %p218 = scmp.eq.s32.totalorder %s21, 0
        // Predicated region
        $region41: #{tpu_custom_call.1} parent=31 // pred_check
          %p219 = pneg %p218
        $region42: #{tpu_custom_call.1} parent=31 // pred_check_branch
          %221 = sbr.rel (%p219) target = $region44
        $region43: #{tpu_custom_call.1} parent=31 // pred_region
          %222 = vst [vmem:[#allocation2] sm:$0x3] 0.0
        $region44: #{tpu_custom_call.1} parent=31 // pred_fallthru
          _
        %v223 = vld [vmem:[#allocation2] sm:$0x3]
        %v224 = vld [vmem:[%s183] sm:$0xf]
        %v225 = vld [vmem:[%s192] sm:$0xf]
        %v226 = vld [vmem:[%s192 + $0x4] sm:$0xf]
        %v227 = vld [vmem:[%s192 + $0x8] sm:$0xf]
        %v228 = vld [vmem:[%s192 + $0xc] sm:$0xf]
        %v229 = vld [vmem:[%s192 + $0x10] sm:$0xf]
        %v230 = vld [vmem:[%s192 + $0x14] sm:$0xf]
        %v231 = vld [vmem:[%s192 + $0x18] sm:$0xf]
        %v232 = vld [vmem:[%s192 + $0x1c] sm:$0xf]
        %v233 = vld [vmem:[%s192 + $0x20] sm:$0xf]
        %v234 = vld [vmem:[%s192 + $0x24] sm:$0xf]
        %v235 = vld [vmem:[%s192 + $0x28] sm:$0xf]
        %v236 = vld [vmem:[%s192 + $0x2c] sm:$0xf]
        %v237 = vld [vmem:[%s192 + $0x30] sm:$0xf]
        %v238 = vld [vmem:[%s192 + $0x34] sm:$0xf]
        %v239 = vld [vmem:[%s192 + $0x38] sm:$0xf]
        %v240 = vld [vmem:[%s192 + $0x3c] sm:$0xf]
        %v241 = vld [vmem:[%s192 + $0x40] sm:$0xf]
        %v242 = vld [vmem:[%s192 + $0x44] sm:$0xf]
        %v243 = vld [vmem:[%s192 + $0x48] sm:$0xf]
        %v244 = vld [vmem:[%s192 + $0x4c] sm:$0xf]
        %v245 = vld [vmem:[%s192 + $0x50] sm:$0xf]
        %v246 = vld [vmem:[%s192 + $0x54] sm:$0xf]
        %v247 = vld [vmem:[%s192 + $0x58] sm:$0xf]
        %v248 = vld [vmem:[%s192 + $0x5c] sm:$0xf]
        %v249 = vld [vmem:[%s192 + $0x60] sm:$0xf]
        %v250 = vld [vmem:[%s192 + $0x64] sm:$0xf]
        %v251 = vld [vmem:[%s192 + $0x68] sm:$0xf]
        %v252 = vld [vmem:[%s192 + $0x6c] sm:$0xf]
        %v253 = vld [vmem:[%s192 + $0x70] sm:$0xf]
        %v254 = vld [vmem:[%s192 + $0x74] sm:$0xf]
        %v255 = vld [vmem:[%s192 + $0x78] sm:$0xf]
        %v256 = vld [vmem:[%s192 + $0x7c] sm:$0xf]
        %v257 = vld [vmem:[%s192 + $0x80] sm:$0xf]
        %v258 = vld [vmem:[%s192 + $0x84] sm:$0xf]
        %v259 = vld [vmem:[%s192 + $0x88] sm:$0xf]
        %v260 = vld [vmem:[%s192 + $0x8c] sm:$0xf]
        %v261 = vld [vmem:[%s192 + $0x90] sm:$0xf]
        %v262 = vld [vmem:[%s192 + $0x94] sm:$0xf]
        %v263 = vld [vmem:[%s192 + $0x98] sm:$0xf]
        %v264 = vld [vmem:[%s192 + $0x9c] sm:$0xf]
        %v265 = vld [vmem:[%s192 + $0xa0] sm:$0xf]
        %v266 = vld [vmem:[%s192 + $0xa4] sm:$0xf]
        %v267 = vld [vmem:[%s192 + $0xa8] sm:$0xf]
        %v268 = vld [vmem:[%s192 + $0xac] sm:$0xf]
        %v269 = vld [vmem:[%s192 + $0xb0] sm:$0xf]
        %v270 = vld [vmem:[%s192 + $0xb4] sm:$0xf]
        %v271 = vld [vmem:[%s192 + $0xb8] sm:$0xf]
        %v272 = vld [vmem:[%s192 + $0xbc] sm:$0xf]
        %v273 = vld [vmem:[%s192 + $0xc0] sm:$0xf]
        %v274 = vld [vmem:[%s192 + $0xc4] sm:$0xf]
        %v275 = vld [vmem:[%s192 + $0xc8] sm:$0xf]
        %v276 = vld [vmem:[%s192 + $0xcc] sm:$0xf]
        %v277 = vld [vmem:[%s192 + $0xd0] sm:$0xf]
        %v278 = vld [vmem:[%s192 + $0xd4] sm:$0xf]
        %v279 = vld [vmem:[%s192 + $0xd8] sm:$0xf]
        %v280 = vld [vmem:[%s192 + $0xdc] sm:$0xf]
        %v281 = vld [vmem:[%s192 + $0xe0] sm:$0xf]
        %v282 = vld [vmem:[%s192 + $0xe4] sm:$0xf]
        %v283 = vld [vmem:[%s192 + $0xe8] sm:$0xf]
        %v284 = vld [vmem:[%s192 + $0xec] sm:$0xf]
        %v285 = vld [vmem:[%s192 + $0xf0] sm:$0xf]
        %v286 = vld [vmem:[%s192 + $0xf4] sm:$0xf]
        %v287 = vld [vmem:[%s192 + $0xf8] sm:$0xf]
        %v288 = vld [vmem:[%s192 + $0xfc] sm:$0xf]
        %v291 = vunpack.c.l.s4 1966171168
        %v292 = vunpack.c.0.s8 %v291
        %v293 = vlaneseq
        %v294 = vshrl.u32 %v293, 7
        %v295 = vsub.s32 %v292, %v294
        %v296 = vrot.slane %v224, %v295
        %v297 = vcombine.high %v296, %v296
        %v299 = vunpack.c.l.s4 1966171168
        %v300 = vunpack.c.0.s8 %v299
        %v301 = vlaneseq
        %v302 = vshrl.u32 %v301, 7
        %v303 = vsub.s32 %v300, %v302
        %v304 = vrot.slane %v296, %v303
        %v306 = vunpack.c.l.s4 1966171168
        %v307 = vunpack.c.0.s8 %v306
        %v308 = vlaneseq
        %v309 = vshrl.u32 %v308, 7
        %v310 = vsub.s32 %v307, %v309
        %v311 = vrot.slane %v297, %v310
        %v312 = vcombine.high %v304, %v304
        %v313 = vcombine.high %v311, %v311
        %v382 = vunpack.c.l.b16 %v225
        %v383 = vunpack.c.l.b16 %v226
        %v384 = vunpack.c.l.b16 %v227
        %v385 = vunpack.c.l.b16 %v228
        %v386 = vunpack.c.l.b16 %v229
        %v387 = vunpack.c.l.b16 %v230
        %v388 = vunpack.c.l.b16 %v231
        %v389 = vunpack.c.l.b16 %v232
        %v390 = vunpack.c.l.b16 %v233
        %v391 = vunpack.c.l.b16 %v234
        %v392 = vunpack.c.l.b16 %v235
        %v393 = vunpack.c.l.b16 %v236
        %v394 = vunpack.c.l.b16 %v237
        %v395 = vunpack.c.l.b16 %v238
        %v396 = vunpack.c.l.b16 %v239
        %v397 = vunpack.c.l.b16 %v240
        %v398 = vunpack.c.l.b16 %v241
        %v399 = vunpack.c.l.b16 %v242
        %v400 = vunpack.c.l.b16 %v243
        %v401 = vunpack.c.l.b16 %v244
        %v402 = vunpack.c.l.b16 %v245
        %v403 = vunpack.c.l.b16 %v246
        %v404 = vunpack.c.l.b16 %v247
        %v405 = vunpack.c.l.b16 %v248
        %v406 = vunpack.c.l.b16 %v249
        %v407 = vunpack.c.l.b16 %v250
        %v408 = vunpack.c.l.b16 %v251
        %v409 = vunpack.c.l.b16 %v252
        %v410 = vunpack.c.l.b16 %v253
        %v411 = vunpack.c.l.b16 %v254
        %v412 = vunpack.c.l.b16 %v255
        %v413 = vunpack.c.l.b16 %v256
        %v414 = vunpack.c.l.b16 %v257
        %v415 = vunpack.c.l.b16 %v258
        %v416 = vunpack.c.l.b16 %v259
        %v417 = vunpack.c.l.b16 %v260
        %v418 = vunpack.c.l.b16 %v261
        %v419 = vunpack.c.l.b16 %v262
        %v420 = vunpack.c.l.b16 %v263
        %v421 = vunpack.c.l.b16 %v264
        %v422 = vunpack.c.l.b16 %v265
        %v423 = vunpack.c.l.b16 %v266
        %v424 = vunpack.c.l.b16 %v267
        %v425 = vunpack.c.l.b16 %v268
        %v426 = vunpack.c.l.b16 %v269
        %v427 = vunpack.c.l.b16 %v270
        %v428 = vunpack.c.l.b16 %v271
        %v429 = vunpack.c.l.b16 %v272
        %v430 = vunpack.c.l.b16 %v273
        %v431 = vunpack.c.l.b16 %v274
        %v432 = vunpack.c.l.b16 %v275
        %v433 = vunpack.c.l.b16 %v276
        %v434 = vunpack.c.l.b16 %v277
        %v435 = vunpack.c.l.b16 %v278
        %v436 = vunpack.c.l.b16 %v279
        %v437 = vunpack.c.l.b16 %v280
        %v438 = vunpack.c.l.b16 %v281
        %v439 = vunpack.c.l.b16 %v282
        %v440 = vunpack.c.l.b16 %v283
        %v441 = vunpack.c.l.b16 %v284
        %v442 = vunpack.c.l.b16 %v285
        %v443 = vunpack.c.l.b16 %v286
        %v444 = vunpack.c.l.b16 %v287
        %v445 = vunpack.c.l.b16 %v288
        %v446 = vpack.c.b16 %v383, %v382
        %v447 = vpack.c.b16 %v385, %v384
        %v448 = vpack.c.b16 %v387, %v386
        %v449 = vpack.c.b16 %v389, %v388
        %v450 = vpack.c.b16 %v391, %v390
        %v451 = vpack.c.b16 %v393, %v392
        %v452 = vpack.c.b16 %v395, %v394
        %v453 = vpack.c.b16 %v397, %v396
        %v454 = vpack.c.b16 %v399, %v398
        %v455 = vpack.c.b16 %v401, %v400
        %v456 = vpack.c.b16 %v403, %v402
        %v457 = vpack.c.b16 %v405, %v404
        %v458 = vpack.c.b16 %v407, %v406
        %v459 = vpack.c.b16 %v409, %v408
        %v460 = vpack.c.b16 %v411, %v410
        %v461 = vpack.c.b16 %v413, %v412
        %v462 = vpack.c.b16 %v415, %v414
        %v463 = vpack.c.b16 %v417, %v416
        %v464 = vpack.c.b16 %v419, %v418
        %v465 = vpack.c.b16 %v421, %v420
        %v466 = vpack.c.b16 %v423, %v422
        %v467 = vpack.c.b16 %v425, %v424
        %v468 = vpack.c.b16 %v427, %v426
        %v469 = vpack.c.b16 %v429, %v428
        %v470 = vpack.c.b16 %v431, %v430
        %v471 = vpack.c.b16 %v433, %v432
        %v472 = vpack.c.b16 %v435, %v434
        %v473 = vpack.c.b16 %v437, %v436
        %v474 = vpack.c.b16 %v439, %v438
        %v475 = vpack.c.b16 %v441, %v440
        %v476 = vpack.c.b16 %v443, %v442
        %v477 = vpack.c.b16 %v445, %v444
        %510 = vmatprep.subr.bf16.mxu0 0
        %511 = vmatpush1.bf16.msra.mxu0 %v446
        %512 = vmatprep.subr.bf16.mxu0 0
        %513 = vmatpush1.bf16.msra.mxu0 %v447
        %514 = vmatprep.subr.bf16.mxu0 0
        %515 = vmatpush1.bf16.msra.mxu0 %v448
        %516 = vmatprep.subr.bf16.mxu0 0
        %517 = vmatpush1.bf16.msra.mxu0 %v449
        %518 = vmatprep.subr.bf16.mxu0 0
        %519 = vmatpush1.bf16.msra.mxu0 %v450
        %520 = vmatprep.subr.bf16.mxu0 0
        %521 = vmatpush1.bf16.msra.mxu0 %v451
        %522 = vmatprep.subr.bf16.mxu0 0
        %523 = vmatpush1.bf16.msra.mxu0 %v452
        %524 = vmatprep.subr.bf16.mxu0 0
        %525 = vmatpush1.bf16.msra.mxu0 %v453
        %526 = vmatprep.subr.bf16.mxu0 0
        %527 = vmatpush1.bf16.msra.mxu0 %v454
        %528 = vmatprep.subr.bf16.mxu0 0
        %529 = vmatpush1.bf16.msra.mxu0 %v455
        %530 = vmatprep.subr.bf16.mxu0 0
        %531 = vmatpush1.bf16.msra.mxu0 %v456
        %532 = vmatprep.subr.bf16.mxu0 0
        %533 = vmatpush1.bf16.msra.mxu0 %v457
        %534 = vmatprep.subr.bf16.mxu0 0
        %535 = vmatpush1.bf16.msra.mxu0 %v458
        %536 = vmatprep.subr.bf16.mxu0 0
        %537 = vmatpush1.bf16.msra.mxu0 %v459
        %538 = vmatprep.subr.bf16.mxu0 0
        %539 = vmatpush1.bf16.msra.mxu0 %v460
        %540 = vmatprep.subr.bf16.mxu0 0
        %541 = vmatpush1.bf16.msra.mxu0 %v461
        %542 = vmatprep.mubr.bf16.mxu0 %v311
        %543 = vmatmul.mubr.bf16.gmra.mrb[0].mxu0 %v304
        %v544 = vpop.f32.mrb[0].mxu0
        %v545 = vadd.f32 0.0, %v544
        %v546 = vpop.f32.mrb[0].mxu0
        %v547 = vpop.f32.mrb[0].mxu0
        %v548 = vpop.f32.mrb[0].mxu0
        %549 = vdwg.mxu0
        %550 = vmatprep.subr.bf16.mxu0 0
        %551 = vmatpush1.bf16.msra.mxu0 %v462
        %552 = vmatprep.subr.bf16.mxu0 0
        %553 = vmatpush1.bf16.msra.mxu0 %v463
        %554 = vmatprep.subr.bf16.mxu0 0
        %555 = vmatpush1.bf16.msra.mxu0 %v464
        %556 = vmatprep.subr.bf16.mxu0 0
        %557 = vmatpush1.bf16.msra.mxu0 %v465
        %558 = vmatprep.subr.bf16.mxu0 0
        %559 = vmatpush1.bf16.msra.mxu0 %v466
        %560 = vmatprep.subr.bf16.mxu0 0
        %561 = vmatpush1.bf16.msra.mxu0 %v467
        %562 = vmatprep.subr.bf16.mxu0 0
        %563 = vmatpush1.bf16.msra.mxu0 %v468
        %564 = vmatprep.subr.bf16.mxu0 0
        %565 = vmatpush1.bf16.msra.mxu0 %v469
        %566 = vmatprep.subr.bf16.mxu0 0
        %567 = vmatpush1.bf16.msra.mxu0 %v470
        %568 = vmatprep.subr.bf16.mxu0 0
        %569 = vmatpush1.bf16.msra.mxu0 %v471
        %570 = vmatprep.subr.bf16.mxu0 0
        %571 = vmatpush1.bf16.msra.mxu0 %v472
        %572 = vmatprep.subr.bf16.mxu0 0
        %573 = vmatpush1.bf16.msra.mxu0 %v473
        %574 = vmatprep.subr.bf16.mxu0 0
        %575 = vmatpush1.bf16.msra.mxu0 %v474
        %576 = vmatprep.subr.bf16.mxu0 0
        %577 = vmatpush1.bf16.msra.mxu0 %v475
        %578 = vmatprep.subr.bf16.mxu0 0
        %579 = vmatpush1.bf16.msra.mxu0 %v476
        %580 = vmatprep.subr.bf16.mxu0 0
        %581 = vmatpush1.bf16.msra.mxu0 %v477
        %582 = vmatprep.mubr.bf16.mxu0 %v313
        %583 = vmatmul.mubr.bf16.gmra.mrb[0].mxu0 %v312
        %v584 = vpop.f32.mrb[0].mxu0
        %v585 = vadd.f32 %v545, %v584
        %v586 = vpop.f32.mrb[0].mxu0
        %v587 = vpop.f32.mrb[0].mxu0
        %v588 = vpop.f32.mrb[0].mxu0
        %589 = vdwg.mxu0
        %v590 = vadd.f32 %v223, %v585
        %591 = vst [vmem:[#allocation2] sm:$0x3] %v590
        %p592 = scmp.eq.s32.totalorder %s21, 1
        // Predicated region
        $region45: #{tpu_custom_call.1} parent=31 // pred_check
          %p593 = pneg %p592
        $region46: #{tpu_custom_call.1} parent=31 // pred_check_branch
          %595 = sbr.rel (%p593) target = $region48
        $region47: #{tpu_custom_call.1} parent=31 // pred_region
          %v596 = vld [vmem:[#allocation2] sm:$0x3]
          %v597 = vld [vmem:[%s2] sm:$0x1]
          %v599 = vlaneseq
          %v600 = vshrl.u32 %v599, 7
          %v601 = vsub.s32 0, %v600
          %v602 = vrot.slane %v597, %v601
          %v604 = vadd.f32 %v596, %v602
          %v605 = vmul.f32 %v604, %v604
          %vm606 = vcmask 1041408
          %v607 = vsel %vm606, %v605, 0.0
          %608 = vadd.xlane.f32.xlu0 %v607
          %v609 = vpop.xlane.xlu0 %608
          %v610 = vmax.f32 %v609, 1e-24
          %v611 = vrsqrt.pop %v610
          %v612 = vmul.f32 %v604, %v611
          %613 = vst [vmem:[#allocation8] sm:$0x3] %v612
        $region48: #{tpu_custom_call.1} parent=31 // pred_fallthru
          _
        // Predicated region
        $region49: #{tpu_custom_call.1} parent=31 // pred_check
          %p614 = pneg %p107
        $region50: #{tpu_custom_call.1} parent=31 // pred_check_branch
          %616 = sbr.rel (%p614) target = $region52
        $region51: #{tpu_custom_call.1} parent=31 // pred_region
          %s618 = ssub.s32 32, 32
          %619 = vsyncadd [#allocation5], %s618
          %s621 = sshll.u32 [#allocation8], 4
          %s622 = int_to_ptr.vmem [resolvable:$true] %s621
          %624 = dma.vmem_to_hbm [thread:$0]  %s622, 32, %s3, [#allocation5]
        $region52: #{tpu_custom_call.1} parent=31 // pred_fallthru
          _
        // Predicated region
        $region53: #{tpu_custom_call.1} parent=31 // pred_check
          %p625 = pneg %p107
        $region54: #{tpu_custom_call.1} parent=31 // pred_check_branch
          %627 = sbr.rel (%p625) target = $region56
        $region55: #{tpu_custom_call.1} parent=31 // pred_region
          %628 = dma.done [#allocation5], 32
        $region56: #{tpu_custom_call.1} parent=31 // pred_fallthru
          _
      $region32: #{tpu_custom_call.1} parent=5 // pred_fallthru
        _
      %p629 = scmp.le.s32.totalorder 2, %s16
      // Predicated region
      $region57: #{tpu_custom_call.1} parent=5 // pred_check
        %p630 = pneg %p629
      $region58: #{tpu_custom_call.1} parent=5 // pred_check_branch
        %632 = sbr.rel (%p630) target = $region60
      $region59: #{tpu_custom_call.1} parent=5 // pred_region
        %s633 = ssub.s32 %s16, 2
      $region60: #{tpu_custom_call.1} parent=5 // pred_fallthru
        _
    $region6: #{tpu_custom_call.1} parent=1 // loop_footer
      %s20 = sadd.s32 1, %s16
    $region7: #{tpu_custom_call.1} parent=1 // loop_footer_branch
      %15 = sbr.rel target = $region3
    $region8: #{tpu_custom_call.1} parent=1 // loop_exit
      _
    %634 = vsyncpa [#allocation4], 1
    %s635 = scalar_lea.sflag [#allocation4], 1
    %636 = vsyncpa %s635, 1
    %637 = vsyncpa [#allocation7], 1
    %s638 = scalar_lea.sflag [#allocation7], 1
    %639 = vsyncpa %s638, 1
    %640 = vsyncpa [#allocation5], 1
    %s641 = scalar_lea.sflag [#allocation5], 1
    %642 = vsyncpa %s641, 1

</llo_original>
